<compile_context>
chip_gen: v7x
topology: tpu7x:2x2x1
jax: 0.10.0
libtpu: 0.0.40
codegen_flags: <defaults>
</compile_context>

<pallas_src>
import jax
import jax.numpy as jnp
from jax.experimental import pallas as pl
from jax.experimental.pallas import tpu as pltpu


def basicblock2_kernel(x_ref,
                       w10_ref, b10_ref,
                       w11_ref, b11_ref,
                       w12_ref, b12_ref,
                       w2_ref, b2_ref,
                       o_ref):
    # x_ref / o_ref are (C, TILE_L) tiles (batch dim squeezed by the BlockSpec).
    x = x_ref[...].astype(jnp.float32)
    C = x.shape[0]

    def conv1x1(w_ref, b_ref, z):
        w = w_ref[...].astype(jnp.float32)          # (C, C)
        b = b_ref[...].astype(jnp.float32)          # (C, 1) -> broadcasts on lanes
        if C <= 32:
            # Tiny channel count: unrolled VPU rank-1 updates.  A (C,C)@(C,T)
            # matmul at C=4 would use <4% of the MXU and pay push/pop latency;
            # C*C fused mul-adds stay in the vector-ALU slots.
            acc = w[:, 0:1] * z[0:1, :]
            for i in range(1, C):
                acc = acc + w[:, i:i + 1] * z[i:i + 1, :]
            return acc + b
        # Large C: channel-mixing matmul on the MXU with f32 accumulation.
        return jnp.dot(w, z, preferred_element_type=jnp.float32) + b

    x2 = x + x                                       # 2*x, reused twice
    y = jnp.maximum(conv1x1(w10_ref, b10_ref, x2), 0.0)   # BasicBlock_1 #0
    y = jnp.maximum(conv1x1(w11_ref, b11_ref, y), 0.0)    # #1 (2x folded into W)
    y = jnp.maximum(conv1x1(w12_ref, b12_ref, y), 0.0)    # #2 (2x folded into W)
    y = jnp.maximum(conv1x1(w2_ref, b2_ref, y + x2), 0.0) # BasicBlock_2 end
    o_ref[...] = y.astype(o_ref.dtype)


def _pick_tile_l(L):
    # Lane-dense tiles (multiple of 128, 128..2048) when L allows; otherwise
    # fall back to the full L (full-array-dim exemption of the (8,128) rule).
    if L % 128 == 0:
        for cand in (2048, 1024, 512, 256, 128):
            if L % cand == 0:
                return cand
    # TODO(synk): for large ragged L, pad L to a multiple of 128 (separate tail
    # call) instead of taking a single full-L block.
    return L


def basicblock2_forward(x_ncl, params):
    """x_ncl: (N, C, L) float32. params: list of 4 (w (C,C,1), b (C,)) tuples
    for the live 1x1 convs: end of the three BasicBlock_1's and BasicBlock_2."""
    N, C, L = x_ncl.shape
    (w10, b10), (w11, b11), (w12, b12), (w2, b2) = params

    # Fold the residual doubling of BasicBlock_1 #1 and #2 into their weights
    # (done once on (C,C) in the wrapper; the kernel then does no scaling).
    w_list = [
        w10.reshape(C, C).astype(jnp.float32),
        (2.0 * w11.reshape(C, C)).astype(jnp.float32),
        (2.0 * w12.reshape(C, C)).astype(jnp.float32),
        w2.reshape(C, C).astype(jnp.float32),
    ]
    b_list = [b.reshape(C, 1).astype(jnp.float32) for b in (b10, b11, b12, b2)]

    tile_l = _pick_tile_l(L)
    grid = (N, L // tile_l)

    # Activations: slice (C, TILE_L) tiles straight from the native NCL layout.
    act_spec = pl.BlockSpec((None, C, tile_l), lambda n, l: (n, 0, l))
    # Weights / biases: small untiled VMEM blocks, same block every grid step.
    w_spec = pl.BlockSpec((C, C), lambda n, l: (0, 0))
    b_spec = pl.BlockSpec((C, 1), lambda n, l: (0, 0))

    ins = [x_ncl]
    for w, b in zip(w_list, b_list):
        ins += [w, b]

    itemsize = jnp.dtype(x_ncl.dtype).itemsize
    flops = 4 * 2 * C * C * N * L + 6 * N * C * L
    bytes_accessed = 2 * N * C * L * itemsize + 4 * (C * C + C) * 4

    return pl.pallas_call(
        basicblock2_kernel,
        out_shape=jax.ShapeDtypeStruct((N, C, L), x_ncl.dtype),
        grid=grid,
        in_specs=[act_spec] + [w_spec, b_spec] * 4,
        out_specs=act_spec,
        compiler_params=pltpu.CompilerParams(
            dimension_semantics=("parallel", "parallel"),
            vmem_limit_bytes=32 * 1024 * 1024,   # safe on v7x (64 MiB physical)
        ),
        cost_estimate=pl.CostEstimate(
            flops=int(flops),
            transcendentals=0,
            bytes_accessed=int(bytes_accessed),
        ),
    )(*ins)


if __name__ == "__main__":
    key = jax.random.PRNGKey(0)
    keys = jax.random.split(key, 9)

    N, C, L = 2, 4, 16
    x = jax.random.normal(keys[0], (N, C, L), dtype=jnp.float32)

    # Deterministic init of the 4 live 1x1 Conv1d layers
    # (end of BasicBlock_1 x3, end of BasicBlock_2).
    params = []
    for i in range(4):
        w = jax.random.normal(keys[1 + 2 * i], (C, C, 1), dtype=jnp.float32) * 0.3
        b = jax.random.normal(keys[2 + 2 * i], (C,), dtype=jnp.float32) * 0.1
        params.append((w, b))

    # Plain-JAX reference of the exact PyTorch forward semantics.
    def ref(xin):
        def c1(w, b, z):
            return jnp.einsum('oi,nil->nol', w[:, :, 0], z) + b[None, :, None]
        y = jax.nn.relu(c1(*params[0], 2.0 * xin))
        y = jax.nn.relu(c1(*params[1], 2.0 * y))
        y = jax.nn.relu(c1(*params[2], 2.0 * y))
        return jax.nn.relu(c1(*params[3], y + 2.0 * xin))

    # 1) toy shape from the module spec (full-L block).
    out = jax.block_until_ready(basicblock2_forward(x, params))
    assert out.shape == (N, C, L)
    assert jnp.allclose(out, ref(x), atol=1e-5, rtol=1e-5)

    # 2) a lane-dense shape (L multiple of 128) to exercise the tiled path.
    L2 = 256
    x2 = jax.random.normal(keys[0], (N, C, L2), dtype=jnp.float32)
    out2 = jax.block_until_ready(basicblock2_forward(x2, params))
    assert out2.shape == (N, C, L2)
    assert jnp.allclose(out2, ref(x2), atol=1e-5, rtol=1e-5)

    print("KERNEL_OK")
</pallas_src>

<mosaic_0001>
module attributes {stable_mosaic.version = 11 : i64} {
  func.func @basicblock2_kernel(%arg0: i32, %arg1: i32, %arg2: memref<1x4x16xf32, #tpu.memory_space<vmem>>, %arg3: memref<4x4xf32, #tpu.memory_space<vmem>>, %arg4: memref<4x1xf32, #tpu.memory_space<vmem>>, %arg5: memref<4x4xf32, #tpu.memory_space<vmem>>, %arg6: memref<4x1xf32, #tpu.memory_space<vmem>>, %arg7: memref<4x4xf32, #tpu.memory_space<vmem>>, %arg8: memref<4x1xf32, #tpu.memory_space<vmem>>, %arg9: memref<4x4xf32, #tpu.memory_space<vmem>>, %arg10: memref<4x1xf32, #tpu.memory_space<vmem>>, %arg11: memref<1x4x16xf32, #tpu.memory_space<vmem>>) attributes {dimension_semantics = [#tpu.dimension_semantics<parallel>, #tpu.dimension_semantics<parallel>], iteration_bounds = array<i64: 2, 1>, scalar_prefetch = 0 : i64, scratch_operands = 0 : i64, tpu.core_type = #tpu.core_type<tc>, window_params = [{transform_indices = @transform_0, window_bounds = array<i64: 1, 4, 16>}, {pipeline_mode = #tpu.pipeline_mode<synchronous>, transform_indices = @transform_1, window_bounds = array<i64: 4, 4>}, {pipeline_mode = #tpu.pipeline_mode<synchronous>, transform_indices = @transform_2, window_bounds = array<i64: 4, 1>}, {pipeline_mode = #tpu.pipeline_mode<synchronous>, transform_indices = @transform_3, window_bounds = array<i64: 4, 4>}, {pipeline_mode = #tpu.pipeline_mode<synchronous>, transform_indices = @transform_4, window_bounds = array<i64: 4, 1>}, {pipeline_mode = #tpu.pipeline_mode<synchronous>, transform_indices = @transform_5, window_bounds = array<i64: 4, 4>}, {pipeline_mode = #tpu.pipeline_mode<synchronous>, transform_indices = @transform_6, window_bounds = array<i64: 4, 1>}, {pipeline_mode = #tpu.pipeline_mode<synchronous>, transform_indices = @transform_7, window_bounds = array<i64: 4, 4>}, {pipeline_mode = #tpu.pipeline_mode<synchronous>, transform_indices = @transform_8, window_bounds = array<i64: 4, 1>}, {transform_indices = @transform_9, window_bounds = array<i64: 1, 4, 16>}]} {
    %c0 = arith.constant 0 : index
    %c0_0 = arith.constant 0 : index
    %c0_1 = arith.constant 0 : index
    %0 = vector.load %arg2[%c0, %c0_0, %c0_1] : memref<1x4x16xf32, #tpu.memory_space<vmem>>, vector<1x4x16xf32>
    %1 = vector.shape_cast %0 : vector<1x4x16xf32> to vector<4x16xf32>
    %2 = arith.addf %1, %1 : vector<4x16xf32>
    %c0_2 = arith.constant 0 : index
    %c0_3 = arith.constant 0 : index
    %3 = vector.load %arg3[%c0_2, %c0_3] : memref<4x4xf32, #tpu.memory_space<vmem>>, vector<4x4xf32>
    %c0_4 = arith.constant 0 : index
    %c0_5 = arith.constant 0 : index
    %4 = vector.load %arg4[%c0_4, %c0_5] : memref<4x1xf32, #tpu.memory_space<vmem>>, vector<4x1xf32>
    %5 = vector.extract_strided_slice %3 {offsets = [0, 0], sizes = [4, 1], strides = [1, 1]} : vector<4x4xf32> to vector<4x1xf32>
    %6 = vector.extract_strided_slice %2 {offsets = [0, 0], sizes = [1, 16], strides = [1, 1]} : vector<4x16xf32> to vector<1x16xf32>
    %7 = vector.broadcast %5 : vector<4x1xf32> to vector<4x16xf32>
    %8 = vector.broadcast %6 : vector<1x16xf32> to vector<4x16xf32>
    %9 = arith.mulf %7, %8 : vector<4x16xf32>
    %10 = vector.extract_strided_slice %3 {offsets = [0, 1], sizes = [4, 1], strides = [1, 1]} : vector<4x4xf32> to vector<4x1xf32>
    %11 = vector.extract_strided_slice %2 {offsets = [1, 0], sizes = [1, 16], strides = [1, 1]} : vector<4x16xf32> to vector<1x16xf32>
    %12 = vector.broadcast %10 : vector<4x1xf32> to vector<4x16xf32>
    %13 = vector.broadcast %11 : vector<1x16xf32> to vector<4x16xf32>
    %14 = arith.mulf %12, %13 : vector<4x16xf32>
    %15 = arith.addf %9, %14 : vector<4x16xf32>
    %16 = vector.extract_strided_slice %3 {offsets = [0, 2], sizes = [4, 1], strides = [1, 1]} : vector<4x4xf32> to vector<4x1xf32>
    %17 = vector.extract_strided_slice %2 {offsets = [2, 0], sizes = [1, 16], strides = [1, 1]} : vector<4x16xf32> to vector<1x16xf32>
    %18 = vector.broadcast %16 : vector<4x1xf32> to vector<4x16xf32>
    %19 = vector.broadcast %17 : vector<1x16xf32> to vector<4x16xf32>
    %20 = arith.mulf %18, %19 : vector<4x16xf32>
    %21 = arith.addf %15, %20 : vector<4x16xf32>
    %22 = vector.extract_strided_slice %3 {offsets = [0, 3], sizes = [4, 1], strides = [1, 1]} : vector<4x4xf32> to vector<4x1xf32>
    %23 = vector.extract_strided_slice %2 {offsets = [3, 0], sizes = [1, 16], strides = [1, 1]} : vector<4x16xf32> to vector<1x16xf32>
    %24 = vector.broadcast %22 : vector<4x1xf32> to vector<4x16xf32>
    %25 = vector.broadcast %23 : vector<1x16xf32> to vector<4x16xf32>
    %26 = arith.mulf %24, %25 : vector<4x16xf32>
    %27 = arith.addf %21, %26 : vector<4x16xf32>
    %28 = vector.broadcast %4 : vector<4x1xf32> to vector<4x16xf32>
    %29 = arith.addf %27, %28 : vector<4x16xf32>
    %cst = arith.constant 0.000000e+00 : f32
    %30 = vector.broadcast %cst : f32 to vector<4x16xf32>
    %31 = arith.maximumf %29, %30 : vector<4x16xf32>
    %c0_6 = arith.constant 0 : index
    %c0_7 = arith.constant 0 : index
    %32 = vector.load %arg5[%c0_6, %c0_7] : memref<4x4xf32, #tpu.memory_space<vmem>>, vector<4x4xf32>
    %c0_8 = arith.constant 0 : index
    %c0_9 = arith.constant 0 : index
    %33 = vector.load %arg6[%c0_8, %c0_9] : memref<4x1xf32, #tpu.memory_space<vmem>>, vector<4x1xf32>
    %34 = vector.extract_strided_slice %32 {offsets = [0, 0], sizes = [4, 1], strides = [1, 1]} : vector<4x4xf32> to vector<4x1xf32>
    %35 = vector.extract_strided_slice %31 {offsets = [0, 0], sizes = [1, 16], strides = [1, 1]} : vector<4x16xf32> to vector<1x16xf32>
    %36 = vector.broadcast %34 : vector<4x1xf32> to vector<4x16xf32>
    %37 = vector.broadcast %35 : vector<1x16xf32> to vector<4x16xf32>
    %38 = arith.mulf %36, %37 : vector<4x16xf32>
    %39 = vector.extract_strided_slice %32 {offsets = [0, 1], sizes = [4, 1], strides = [1, 1]} : vector<4x4xf32> to vector<4x1xf32>
    %40 = vector.extract_strided_slice %31 {offsets = [1, 0], sizes = [1, 16], strides = [1, 1]} : vector<4x16xf32> to vector<1x16xf32>
    %41 = vector.broadcast %39 : vector<4x1xf32> to vector<4x16xf32>
    %42 = vector.broadcast %40 : vector<1x16xf32> to vector<4x16xf32>
    %43 = arith.mulf %41, %42 : vector<4x16xf32>
    %44 = arith.addf %38, %43 : vector<4x16xf32>
    %45 = vector.extract_strided_slice %32 {offsets = [0, 2], sizes = [4, 1], strides = [1, 1]} : vector<4x4xf32> to vector<4x1xf32>
    %46 = vector.extract_strided_slice %31 {offsets = [2, 0], sizes = [1, 16], strides = [1, 1]} : vector<4x16xf32> to vector<1x16xf32>
    %47 = vector.broadcast %45 : vector<4x1xf32> to vector<4x16xf32>
    %48 = vector.broadcast %46 : vector<1x16xf32> to vector<4x16xf32>
    %49 = arith.mulf %47, %48 : vector<4x16xf32>
    %50 = arith.addf %44, %49 : vector<4x16xf32>
    %51 = vector.extract_strided_slice %32 {offsets = [0, 3], sizes = [4, 1], strides = [1, 1]} : vector<4x4xf32> to vector<4x1xf32>
    %52 = vector.extract_strided_slice %31 {offsets = [3, 0], sizes = [1, 16], strides = [1, 1]} : vector<4x16xf32> to vector<1x16xf32>
    %53 = vector.broadcast %51 : vector<4x1xf32> to vector<4x16xf32>
    %54 = vector.broadcast %52 : vector<1x16xf32> to vector<4x16xf32>
    %55 = arith.mulf %53, %54 : vector<4x16xf32>
    %56 = arith.addf %50, %55 : vector<4x16xf32>
    %57 = vector.broadcast %33 : vector<4x1xf32> to vector<4x16xf32>
    %58 = arith.addf %56, %57 : vector<4x16xf32>
    %cst_10 = arith.constant 0.000000e+00 : f32
    %59 = vector.broadcast %cst_10 : f32 to vector<4x16xf32>
    %60 = arith.maximumf %58, %59 : vector<4x16xf32>
    %c0_11 = arith.constant 0 : index
    %c0_12 = arith.constant 0 : index
    %61 = vector.load %arg7[%c0_11, %c0_12] : memref<4x4xf32, #tpu.memory_space<vmem>>, vector<4x4xf32>
    %c0_13 = arith.constant 0 : index
    %c0_14 = arith.constant 0 : index
    %62 = vector.load %arg8[%c0_13, %c0_14] : memref<4x1xf32, #tpu.memory_space<vmem>>, vector<4x1xf32>
    %63 = vector.extract_strided_slice %61 {offsets = [0, 0], sizes = [4, 1], strides = [1, 1]} : vector<4x4xf32> to vector<4x1xf32>
    %64 = vector.extract_strided_slice %60 {offsets = [0, 0], sizes = [1, 16], strides = [1, 1]} : vector<4x16xf32> to vector<1x16xf32>
    %65 = vector.broadcast %63 : vector<4x1xf32> to vector<4x16xf32>
    %66 = vector.broadcast %64 : vector<1x16xf32> to vector<4x16xf32>
    %67 = arith.mulf %65, %66 : vector<4x16xf32>
    %68 = vector.extract_strided_slice %61 {offsets = [0, 1], sizes = [4, 1], strides = [1, 1]} : vector<4x4xf32> to vector<4x1xf32>
    %69 = vector.extract_strided_slice %60 {offsets = [1, 0], sizes = [1, 16], strides = [1, 1]} : vector<4x16xf32> to vector<1x16xf32>
    %70 = vector.broadcast %68 : vector<4x1xf32> to vector<4x16xf32>
    %71 = vector.broadcast %69 : vector<1x16xf32> to vector<4x16xf32>
    %72 = arith.mulf %70, %71 : vector<4x16xf32>
    %73 = arith.addf %67, %72 : vector<4x16xf32>
    %74 = vector.extract_strided_slice %61 {offsets = [0, 2], sizes = [4, 1], strides = [1, 1]} : vector<4x4xf32> to vector<4x1xf32>
    %75 = vector.extract_strided_slice %60 {offsets = [2, 0], sizes = [1, 16], strides = [1, 1]} : vector<4x16xf32> to vector<1x16xf32>
    %76 = vector.broadcast %74 : vector<4x1xf32> to vector<4x16xf32>
    %77 = vector.broadcast %75 : vector<1x16xf32> to vector<4x16xf32>
    %78 = arith.mulf %76, %77 : vector<4x16xf32>
    %79 = arith.addf %73, %78 : vector<4x16xf32>
    %80 = vector.extract_strided_slice %61 {offsets = [0, 3], sizes = [4, 1], strides = [1, 1]} : vector<4x4xf32> to vector<4x1xf32>
    %81 = vector.extract_strided_slice %60 {offsets = [3, 0], sizes = [1, 16], strides = [1, 1]} : vector<4x16xf32> to vector<1x16xf32>
    %82 = vector.broadcast %80 : vector<4x1xf32> to vector<4x16xf32>
    %83 = vector.broadcast %81 : vector<1x16xf32> to vector<4x16xf32>
    %84 = arith.mulf %82, %83 : vector<4x16xf32>
    %85 = arith.addf %79, %84 : vector<4x16xf32>
    %86 = vector.broadcast %62 : vector<4x1xf32> to vector<4x16xf32>
    %87 = arith.addf %85, %86 : vector<4x16xf32>
    %cst_15 = arith.constant 0.000000e+00 : f32
    %88 = vector.broadcast %cst_15 : f32 to vector<4x16xf32>
    %89 = arith.maximumf %87, %88 : vector<4x16xf32>
    %90 = arith.addf %89, %2 : vector<4x16xf32>
    %c0_16 = arith.constant 0 : index
    %c0_17 = arith.constant 0 : index
    %91 = vector.load %arg9[%c0_16, %c0_17] : memref<4x4xf32, #tpu.memory_space<vmem>>, vector<4x4xf32>
    %c0_18 = arith.constant 0 : index
    %c0_19 = arith.constant 0 : index
    %92 = vector.load %arg10[%c0_18, %c0_19] : memref<4x1xf32, #tpu.memory_space<vmem>>, vector<4x1xf32>
    %93 = vector.extract_strided_slice %91 {offsets = [0, 0], sizes = [4, 1], strides = [1, 1]} : vector<4x4xf32> to vector<4x1xf32>
    %94 = vector.extract_strided_slice %90 {offsets = [0, 0], sizes = [1, 16], strides = [1, 1]} : vector<4x16xf32> to vector<1x16xf32>
    %95 = vector.broadcast %93 : vector<4x1xf32> to vector<4x16xf32>
    %96 = vector.broadcast %94 : vector<1x16xf32> to vector<4x16xf32>
    %97 = arith.mulf %95, %96 : vector<4x16xf32>
    %98 = vector.extract_strided_slice %91 {offsets = [0, 1], sizes = [4, 1], strides = [1, 1]} : vector<4x4xf32> to vector<4x1xf32>
    %99 = vector.extract_strided_slice %90 {offsets = [1, 0], sizes = [1, 16], strides = [1, 1]} : vector<4x16xf32> to vector<1x16xf32>
    %100 = vector.broadcast %98 : vector<4x1xf32> to vector<4x16xf32>
    %101 = vector.broadcast %99 : vector<1x16xf32> to vector<4x16xf32>
    %102 = arith.mulf %100, %101 : vector<4x16xf32>
    %103 = arith.addf %97, %102 : vector<4x16xf32>
    %104 = vector.extract_strided_slice %91 {offsets = [0, 2], sizes = [4, 1], strides = [1, 1]} : vector<4x4xf32> to vector<4x1xf32>
    %105 = vector.extract_strided_slice %90 {offsets = [2, 0], sizes = [1, 16], strides = [1, 1]} : vector<4x16xf32> to vector<1x16xf32>
    %106 = vector.broadcast %104 : vector<4x1xf32> to vector<4x16xf32>
    %107 = vector.broadcast %105 : vector<1x16xf32> to vector<4x16xf32>
    %108 = arith.mulf %106, %107 : vector<4x16xf32>
    %109 = arith.addf %103, %108 : vector<4x16xf32>
    %110 = vector.extract_strided_slice %91 {offsets = [0, 3], sizes = [4, 1], strides = [1, 1]} : vector<4x4xf32> to vector<4x1xf32>
    %111 = vector.extract_strided_slice %90 {offsets = [3, 0], sizes = [1, 16], strides = [1, 1]} : vector<4x16xf32> to vector<1x16xf32>
    %112 = vector.broadcast %110 : vector<4x1xf32> to vector<4x16xf32>
    %113 = vector.broadcast %111 : vector<1x16xf32> to vector<4x16xf32>
    %114 = arith.mulf %112, %113 : vector<4x16xf32>
    %115 = arith.addf %109, %114 : vector<4x16xf32>
    %116 = vector.broadcast %92 : vector<4x1xf32> to vector<4x16xf32>
    %117 = arith.addf %115, %116 : vector<4x16xf32>
    %cst_20 = arith.constant 0.000000e+00 : f32
    %118 = vector.broadcast %cst_20 : f32 to vector<4x16xf32>
    %119 = arith.maximumf %117, %118 : vector<4x16xf32>
    %c0_21 = arith.constant 0 : index
    %c0_22 = arith.constant 0 : index
    %c0_23 = arith.constant 0 : index
    %120 = vector.load %arg11[%c0_21, %c0_22, %c0_23] : memref<1x4x16xf32, #tpu.memory_space<vmem>>, vector<1x4x16xf32>
    %121 = vector.shape_cast %120 : vector<1x4x16xf32> to vector<4x16xf32>
    %122 = vector.shape_cast %119 : vector<4x16xf32> to vector<1x4x16xf32>
    tpu.vector_store %arg11[%c0_21, %c0_22, %c0_23], %122 {strides = array<i32>} : memref<1x4x16xf32, #tpu.memory_space<vmem>>, vector<1x4x16xf32>,
    return
  }
  func.func @transform_0(%arg0: i32, %arg1: i32) -> (i32, i32, i32) {
    %c0_i32 = arith.constant 0 : i32
    %c0_i32_0 = arith.constant 0 : i32
    return %arg0, %c0_i32, %arg1 : i32, i32, i32
  }
  func.func @transform_1(%arg0: i32, %arg1: i32) -> (i32, i32) {
    %c0_i32 = arith.constant 0 : i32
    %c0_i32_0 = arith.constant 0 : i32
    %c0_i32_1 = arith.constant 0 : i32
    return %c0_i32, %c0_i32_0 : i32, i32
  }
  func.func @transform_2(%arg0: i32, %arg1: i32) -> (i32, i32) {
    %c0_i32 = arith.constant 0 : i32
    %c0_i32_0 = arith.constant 0 : i32
    %c0_i32_1 = arith.constant 0 : i32
    return %c0_i32, %c0_i32_0 : i32, i32
  }
  func.func @transform_3(%arg0: i32, %arg1: i32) -> (i32, i32) {
    %c0_i32 = arith.constant 0 : i32
    %c0_i32_0 = arith.constant 0 : i32
    %c0_i32_1 = arith.constant 0 : i32
    return %c0_i32, %c0_i32_0 : i32, i32
  }
  func.func @transform_4(%arg0: i32, %arg1: i32) -> (i32, i32) {
    %c0_i32 = arith.constant 0 : i32
    %c0_i32_0 = arith.constant 0 : i32
    %c0_i32_1 = arith.constant 0 : i32
    return %c0_i32, %c0_i32_0 : i32, i32
  }
  func.func @transform_5(%arg0: i32, %arg1: i32) -> (i32, i32) {
    %c0_i32 = arith.constant 0 : i32
    %c0_i32_0 = arith.constant 0 : i32
    %c0_i32_1 = arith.constant 0 : i32
    return %c0_i32, %c0_i32_0 : i32, i32
  }
  func.func @transform_6(%arg0: i32, %arg1: i32) -> (i32, i32) {
    %c0_i32 = arith.constant 0 : i32
    %c0_i32_0 = arith.constant 0 : i32
    %c0_i32_1 = arith.constant 0 : i32
    return %c0_i32, %c0_i32_0 : i32, i32
  }
  func.func @transform_7(%arg0: i32, %arg1: i32) -> (i32, i32) {
    %c0_i32 = arith.constant 0 : i32
    %c0_i32_0 = arith.constant 0 : i32
    %c0_i32_1 = arith.constant 0 : i32
    return %c0_i32, %c0_i32_0 : i32, i32
  }
  func.func @transform_8(%arg0: i32, %arg1: i32) -> (i32, i32) {
    %c0_i32 = arith.constant 0 : i32
    %c0_i32_0 = arith.constant 0 : i32
    %c0_i32_1 = arith.constant 0 : i32
    return %c0_i32, %c0_i32_0 : i32, i32
  }
  func.func @transform_9(%arg0: i32, %arg1: i32) -> (i32, i32, i32) {
    %c0_i32 = arith.constant 0 : i32
    %c0_i32_0 = arith.constant 0 : i32
    return %arg0, %c0_i32, %arg1 : i32, i32, i32
  }
}

</mosaic_0001>

<llo_original>
// kernel: tpu_custom_call.1
$region0: #{tpu_custom_call.1}
  #allocation0 [shape = 'u32[]', space=smem, size = 0x4, offset = 0x4, fixed_abs, tag = 'smem constant byte address 0x4 - core index']
  #allocation1 [shape = 'u32[144,128]{1,0:T(1,128)}', space=vmem, size = 0x12000, scoped, tag = 'internal scratch']
  %s0 = inlined_call_operand.vmem [shape: f32[2,4,16], index: 0, kind: input, shape index: {}]
  %s1 = inlined_call_operand.vmem [shape: f32[4,4], index: 1, kind: input, shape index: {}]
  %s2 = inlined_call_operand.vmem [shape: f32[4,1], index: 2, kind: input, shape index: {}]
  %s3 = inlined_call_operand.vmem [shape: f32[4,4], index: 3, kind: input, shape index: {}]
  %s4 = inlined_call_operand.vmem [shape: f32[4,1], index: 4, kind: input, shape index: {}]
  %s5 = inlined_call_operand.vmem [shape: f32[4,4], index: 5, kind: input, shape index: {}]
  %s6 = inlined_call_operand.vmem [shape: f32[4,1], index: 6, kind: input, shape index: {}]
  %s7 = inlined_call_operand.vmem [shape: f32[4,4], index: 7, kind: input, shape index: {}]
  %s8 = inlined_call_operand.vmem [shape: f32[4,1], index: 8, kind: input, shape index: {}]
  %s9 = inlined_call_operand.hbm [shape: f32[2,4,16], index: 9, kind: output, shape index: {}]
  %s10 = sld [smem:[#allocation0]]
  $region69: #{tpu_custom_call.1} parent=0
    _
  %s12 = ssub.s32 1, %s10
  %s13 = scalar_select 0, %s12, %s10
  $region1: #{tpu_custom_call.1} parent=0
    #allocation2 [shape = 'u8[4096]{0}', space=vmem, size = 0x1000, scoped, tag = 'output window, operand 0']
    #allocation3 [shape = 's32[2]{0}', space=sflag, size = 0x8, scoped, tag = 'scoped memory for tpu_custom_call.1']
    %14 = vsyncpa [#allocation3], 0
    %s15 = scalar_lea.sflag [#allocation3], 1
    %16 = vsyncpa %s15, 0
    loop: start=0, step=1, limit=4
    $region2: #{tpu_custom_call.1} parent=1 // loop_pre_header
      _
    $region3: #{tpu_custom_call.1} parent=1 // loop_header
      %s18 = sphi 0, %s22
      %p19 = scmp.ge.s32.totalorder %s18, 4
      %s25 = sphi 0, %s37
      %s26 = sphi 0, %s33
      %s27 = sphi 0, %s25
      %s28 = sphi 0, %s26
      %s29 = sphi 0, %s27
      %s30 = sphi 0, %s28
      %s42 = sphi 0, %s44
      %s45 = sphi 0, %s42
      %s46 = sphi 0, %s45
      %s62 = sphi 0, %s46
      %s66 = sphi 0, %s66
      %s68 = sphi 0, %s66
      %s69 = sphi 0, %s68
      %s83 = sphi 0, %s69
      %s87 = sphi 0, %s87
      %s89 = sphi 0, %s87
      %s90 = sphi 0, %s89
      %s104 = sphi 0, %s90
      %s108 = sphi 0, %s108
      %s110 = sphi 0, %s108
      %s111 = sphi 0, %s110
      %s125 = sphi 0, %s111
      %s129 = sphi 0, %s129
      %s131 = sphi 0, %s129
      %s132 = sphi 0, %s131
      %s146 = sphi 0, %s132
      %s150 = sphi 0, %s150
      %s152 = sphi 0, %s150
      %s153 = sphi 0, %s152
      %s167 = sphi 0, %s153
      %s171 = sphi 0, %s171
      %s173 = sphi 0, %s171
      %s174 = sphi 0, %s173
      %s188 = sphi 0, %s174
      %s192 = sphi 0, %s192
      %s194 = sphi 0, %s192
      %s195 = sphi 0, %s194
      %s209 = sphi 0, %s195
      %s213 = sphi 0, %s213
      %s215 = sphi 0, %s213
      %s216 = sphi 0, %s215
      %s230 = sphi 0, %s216
      %s238 = sphi 0, %s240
      %s241 = sphi 0, %s238
      %s242 = sphi 0, %s241
      %s258 = sphi 0, %s242
    $region4: #{tpu_custom_call.1} parent=1 // loop_header_branch
      %21 = sbr.rel (%p19) target = $region8
    $region5: #{tpu_custom_call.1} parent=1 // loop_body
      %s23 = ssub.s32 %s18, 1
      %s24 = ssub.s32 %s18, 2
      %s31 = sadd.s32 1, %s26
      %p32 = scmp.ge.s32.totalorder %s31, 1
      %s33 = scalar_select %p32, 0, %s31
      %s34 = sadd.s32 1, %s25
      %s35 = scalar_select %p32, %s34, %s25
      %p36 = scmp.ge.s32.totalorder %s35, 2
      %s37 = scalar_select %p36, 0, %s35
      %s38 = ssub.s32 %s25, %s37
      %s39 = ssub.s32 %s26, %s33
      %s40 = sor.u32 %s38, %s39
      %p41 = scmp.eq.s32.totalorder %s40, 0
      %s43 = sadd.s32 %s42, 1
      %s44 = scalar_select %p41, %s42, %s43
      %p47 = pneg %p41
      %p48 = scmp.eq.s32.totalorder %s18, 1
      %p49 = por %p47, %p48
      %p50 = scmp.ne.s32.totalorder %s42, %s45
      %p51 = scmp.eq.s32.totalorder %s18, 0
      %p52 = por %p50, %p51
      %p53 = scmp.ne.s32.totalorder %s42, %s45
      %p54 = scmp.eq.s32.totalorder %s23, 1
      %p55 = por %p53, %p54
      %p56 = scmp.ne.s32.totalorder %s45, %s46
      %p57 = scmp.eq.s32.totalorder %s23, 0
      %p58 = por %p56, %p57
      %p59 = scmp.ne.s32.totalorder %s45, %s46
      %p60 = scmp.eq.s32.totalorder %s24, 1
      %p61 = por %p59, %p60
      %p63 = scmp.ne.s32.totalorder %s46, %s62
      %p64 = scmp.eq.s32.totalorder %s24, 0
      %p65 = por %p63, %p64
      %s67 = sadd.s32 %s66, 1
      %p70 = scmp.eq.s32.totalorder %s18, 1
      %p71 = scmp.ne.s32.totalorder %s66, %s68
      %p72 = scmp.eq.s32.totalorder %s18, 0
      %p73 = por %p71, %p72
      %p74 = scmp.ne.s32.totalorder %s66, %s68
      %p75 = scmp.eq.s32.totalorder %s23, 1
      %p76 = por %p74, %p75
      %p77 = scmp.ne.s32.totalorder %s68, %s69
      %p78 = scmp.eq.s32.totalorder %s23, 0
      %p79 = por %p77, %p78
      %p80 = scmp.ne.s32.totalorder %s68, %s69
      %p81 = scmp.eq.s32.totalorder %s24, 1
      %p82 = por %p80, %p81
      %p84 = scmp.ne.s32.totalorder %s69, %s83
      %p85 = scmp.eq.s32.totalorder %s24, 0
      %p86 = por %p84, %p85
      %s88 = sadd.s32 %s87, 1
      %p91 = scmp.eq.s32.totalorder %s18, 1
      %p92 = scmp.ne.s32.totalorder %s87, %s89
      %p93 = scmp.eq.s32.totalorder %s18, 0
      %p94 = por %p92, %p93
      %p95 = scmp.ne.s32.totalorder %s87, %s89
      %p96 = scmp.eq.s32.totalorder %s23, 1
      %p97 = por %p95, %p96
      %p98 = scmp.ne.s32.totalorder %s89, %s90
      %p99 = scmp.eq.s32.totalorder %s23, 0
      %p100 = por %p98, %p99
      %p101 = scmp.ne.s32.totalorder %s89, %s90
      %p102 = scmp.eq.s32.totalorder %s24, 1
      %p103 = por %p101, %p102
      %p105 = scmp.ne.s32.totalorder %s90, %s104
      %p106 = scmp.eq.s32.totalorder %s24, 0
      %p107 = por %p105, %p106
      %s109 = sadd.s32 %s108, 1
      %p112 = scmp.eq.s32.totalorder %s18, 1
      %p113 = scmp.ne.s32.totalorder %s108, %s110
      %p114 = scmp.eq.s32.totalorder %s18, 0
      %p115 = por %p113, %p114
      %p116 = scmp.ne.s32.totalorder %s108, %s110
      %p117 = scmp.eq.s32.totalorder %s23, 1
      %p118 = por %p116, %p117
      %p119 = scmp.ne.s32.totalorder %s110, %s111
      %p120 = scmp.eq.s32.totalorder %s23, 0
      %p121 = por %p119, %p120
      %p122 = scmp.ne.s32.totalorder %s110, %s111
      %p123 = scmp.eq.s32.totalorder %s24, 1
      %p124 = por %p122, %p123
      %p126 = scmp.ne.s32.totalorder %s111, %s125
      %p127 = scmp.eq.s32.totalorder %s24, 0
      %p128 = por %p126, %p127
      %s130 = sadd.s32 %s129, 1
      %p133 = scmp.eq.s32.totalorder %s18, 1
      %p134 = scmp.ne.s32.totalorder %s129, %s131
      %p135 = scmp.eq.s32.totalorder %s18, 0
      %p136 = por %p134, %p135
      %p137 = scmp.ne.s32.totalorder %s129, %s131
      %p138 = scmp.eq.s32.totalorder %s23, 1
      %p139 = por %p137, %p138
      %p140 = scmp.ne.s32.totalorder %s131, %s132
      %p141 = scmp.eq.s32.totalorder %s23, 0
      %p142 = por %p140, %p141
      %p143 = scmp.ne.s32.totalorder %s131, %s132
      %p144 = scmp.eq.s32.totalorder %s24, 1
      %p145 = por %p143, %p144
      %p147 = scmp.ne.s32.totalorder %s132, %s146
      %p148 = scmp.eq.s32.totalorder %s24, 0
      %p149 = por %p147, %p148
      %s151 = sadd.s32 %s150, 1
      %p154 = scmp.eq.s32.totalorder %s18, 1
      %p155 = scmp.ne.s32.totalorder %s150, %s152
      %p156 = scmp.eq.s32.totalorder %s18, 0
      %p157 = por %p155, %p156
      %p158 = scmp.ne.s32.totalorder %s150, %s152
      %p159 = scmp.eq.s32.totalorder %s23, 1
      %p160 = por %p158, %p159
      %p161 = scmp.ne.s32.totalorder %s152, %s153
      %p162 = scmp.eq.s32.totalorder %s23, 0
      %p163 = por %p161, %p162
      %p164 = scmp.ne.s32.totalorder %s152, %s153
      %p165 = scmp.eq.s32.totalorder %s24, 1
      %p166 = por %p164, %p165
      %p168 = scmp.ne.s32.totalorder %s153, %s167
      %p169 = scmp.eq.s32.totalorder %s24, 0
      %p170 = por %p168, %p169
      %s172 = sadd.s32 %s171, 1
      %p175 = scmp.eq.s32.totalorder %s18, 1
      %p176 = scmp.ne.s32.totalorder %s171, %s173
      %p177 = scmp.eq.s32.totalorder %s18, 0
      %p178 = por %p176, %p177
      %p179 = scmp.ne.s32.totalorder %s171, %s173
      %p180 = scmp.eq.s32.totalorder %s23, 1
      %p181 = por %p179, %p180
      %p182 = scmp.ne.s32.totalorder %s173, %s174
      %p183 = scmp.eq.s32.totalorder %s23, 0
      %p184 = por %p182, %p183
      %p185 = scmp.ne.s32.totalorder %s173, %s174
      %p186 = scmp.eq.s32.totalorder %s24, 1
      %p187 = por %p185, %p186
      %p189 = scmp.ne.s32.totalorder %s174, %s188
      %p190 = scmp.eq.s32.totalorder %s24, 0
      %p191 = por %p189, %p190
      %s193 = sadd.s32 %s192, 1
      %p196 = scmp.eq.s32.totalorder %s18, 1
      %p197 = scmp.ne.s32.totalorder %s192, %s194
      %p198 = scmp.eq.s32.totalorder %s18, 0
      %p199 = por %p197, %p198
      %p200 = scmp.ne.s32.totalorder %s192, %s194
      %p201 = scmp.eq.s32.totalorder %s23, 1
      %p202 = por %p200, %p201
      %p203 = scmp.ne.s32.totalorder %s194, %s195
      %p204 = scmp.eq.s32.totalorder %s23, 0
      %p205 = por %p203, %p204
      %p206 = scmp.ne.s32.totalorder %s194, %s195
      %p207 = scmp.eq.s32.totalorder %s24, 1
      %p208 = por %p206, %p207
      %p210 = scmp.ne.s32.totalorder %s195, %s209
      %p211 = scmp.eq.s32.totalorder %s24, 0
      %p212 = por %p210, %p211
      %s214 = sadd.s32 %s213, 1
      %p217 = scmp.eq.s32.totalorder %s18, 1
      %p218 = scmp.ne.s32.totalorder %s213, %s215
      %p219 = scmp.eq.s32.totalorder %s18, 0
      %p220 = por %p218, %p219
      %p221 = scmp.ne.s32.totalorder %s213, %s215
      %p222 = scmp.eq.s32.totalorder %s23, 1
      %p223 = por %p221, %p222
      %p224 = scmp.ne.s32.totalorder %s215, %s216
      %p225 = scmp.eq.s32.totalorder %s23, 0
      %p226 = por %p224, %p225
      %p227 = scmp.ne.s32.totalorder %s215, %s216
      %p228 = scmp.eq.s32.totalorder %s24, 1
      %p229 = por %p227, %p228
      %p231 = scmp.ne.s32.totalorder %s216, %s230
      %p232 = scmp.eq.s32.totalorder %s24, 0
      %p233 = por %p231, %p232
      %s234 = ssub.s32 %s25, %s37
      %s235 = ssub.s32 %s26, %s33
      %s236 = sor.u32 %s234, %s235
      %p237 = scmp.eq.s32.totalorder %s236, 0
      %s239 = sadd.s32 %s238, 1
      %s240 = scalar_select %p237, %s238, %s239
      %p243 = pneg %p237
      %p244 = scmp.eq.s32.totalorder %s18, 1
      %p245 = por %p243, %p244
      %p246 = scmp.ne.s32.totalorder %s238, %s241
      %p247 = scmp.eq.s32.totalorder %s18, 0
      %p248 = por %p246, %p247
      %p249 = scmp.ne.s32.totalorder %s238, %s241
      %p250 = scmp.eq.s32.totalorder %s23, 1
      %p251 = por %p249, %p250
      %p252 = scmp.ne.s32.totalorder %s241, %s242
      %p253 = scmp.eq.s32.totalorder %s23, 0
      %p254 = por %p252, %p253
      %p255 = scmp.ne.s32.totalorder %s241, %s242
      %p256 = scmp.eq.s32.totalorder %s24, 1
      %p257 = por %p255, %p256
      %p259 = scmp.ne.s32.totalorder %s242, %s258
      %p260 = scmp.eq.s32.totalorder %s24, 0
      %p261 = por %p259, %p260
      %p262 = scmp.le.s32.totalorder 1, %s18
      %p263 = scmp.lt.s32.totalorder %s18, 3
      %p264 = pnand %p262, %p263
      %p265 = pneg %p264
      // Predicated region
      $region9: #{tpu_custom_call.1} parent=5 // pred_check
        _
      $region10: #{tpu_custom_call.1} parent=5 // pred_check_branch
        %267 = sbr.rel (%p264) target = $region12
      $region11: #{tpu_custom_call.1} parent=5 // pred_region
        %s268 = ssub.s32 %s18, 1
        // Predicated region
        $region13: #{tpu_custom_call.1} parent=11 // pred_check
          %p269 = pneg %p79
        $region14: #{tpu_custom_call.1} parent=11 // pred_check_branch
          %271 = sbr.rel (%p269) target = $region16
        $region15: #{tpu_custom_call.1} parent=11 // pred_region
          _
        $region16: #{tpu_custom_call.1} parent=11 // pred_fallthru
          _
        // Predicated region
        $region17: #{tpu_custom_call.1} parent=11 // pred_check
          %p272 = pneg %p100
        $region18: #{tpu_custom_call.1} parent=11 // pred_check_branch
          %274 = sbr.rel (%p272) target = $region20
        $region19: #{tpu_custom_call.1} parent=11 // pred_region
          _
        $region20: #{tpu_custom_call.1} parent=11 // pred_fallthru
          _
        // Predicated region
        $region21: #{tpu_custom_call.1} parent=11 // pred_check
          %p275 = pneg %p121
        $region22: #{tpu_custom_call.1} parent=11 // pred_check_branch
          %277 = sbr.rel (%p275) target = $region24
        $region23: #{tpu_custom_call.1} parent=11 // pred_region
          _
        $region24: #{tpu_custom_call.1} parent=11 // pred_fallthru
          _
        // Predicated region
        $region25: #{tpu_custom_call.1} parent=11 // pred_check
          %p278 = pneg %p142
        $region26: #{tpu_custom_call.1} parent=11 // pred_check_branch
          %280 = sbr.rel (%p278) target = $region28
        $region27: #{tpu_custom_call.1} parent=11 // pred_region
          _
        $region28: #{tpu_custom_call.1} parent=11 // pred_fallthru
          _
        // Predicated region
        $region29: #{tpu_custom_call.1} parent=11 // pred_check
          %p281 = pneg %p163
        $region30: #{tpu_custom_call.1} parent=11 // pred_check_branch
          %283 = sbr.rel (%p281) target = $region32
        $region31: #{tpu_custom_call.1} parent=11 // pred_region
          _
        $region32: #{tpu_custom_call.1} parent=11 // pred_fallthru
          _
        // Predicated region
        $region33: #{tpu_custom_call.1} parent=11 // pred_check
          %p284 = pneg %p184
        $region34: #{tpu_custom_call.1} parent=11 // pred_check_branch
          %286 = sbr.rel (%p284) target = $region36
        $region35: #{tpu_custom_call.1} parent=11 // pred_region
          _
        $region36: #{tpu_custom_call.1} parent=11 // pred_fallthru
          _
        // Predicated region
        $region37: #{tpu_custom_call.1} parent=11 // pred_check
          %p287 = pneg %p205
        $region38: #{tpu_custom_call.1} parent=11 // pred_check_branch
          %289 = sbr.rel (%p287) target = $region40
        $region39: #{tpu_custom_call.1} parent=11 // pred_region
          _
        $region40: #{tpu_custom_call.1} parent=11 // pred_fallthru
          _
        // Predicated region
        $region41: #{tpu_custom_call.1} parent=11 // pred_check
          %p290 = pneg %p226
        $region42: #{tpu_custom_call.1} parent=11 // pred_check_branch
          %292 = sbr.rel (%p290) target = $region44
        $region43: #{tpu_custom_call.1} parent=11 // pred_region
          _
        $region44: #{tpu_custom_call.1} parent=11 // pred_fallthru
          _
      $region12: #{tpu_custom_call.1} parent=5 // pred_fallthru
        _
      %p293 = scmp.lt.s32.totalorder %s18, 2
      // Predicated region
      $region45: #{tpu_custom_call.1} parent=5 // pred_check
        %p294 = pneg %p293
      $region46: #{tpu_custom_call.1} parent=5 // pred_check_branch
        %296 = sbr.rel (%p294) target = $region48
      $region47: #{tpu_custom_call.1} parent=5 // pred_region
        // Predicated region
        $region49: #{tpu_custom_call.1} parent=47 // pred_check
          %p297 = pneg %p52
        $region50: #{tpu_custom_call.1} parent=47 // pred_check_branch
          %299 = sbr.rel (%p297) target = $region52
        $region51: #{tpu_custom_call.1} parent=47 // pred_region
          %p300 = scmp.lt.s32.totalorder %s25, 1
          %s301 = scalar_select %p300, %s25, 1
          %p302 = scmp.lt.s32.totalorder %s26, 0
          %s303 = scalar_select %p302, %s26, 0
          %s304 = sadd.s32 %s303, %s301
          %s305 = smul.addr %s304, 4
          %s306 = scalar_lea.vmem %s0, %s305
        $region52: #{tpu_custom_call.1} parent=47 // pred_fallthru
          _
      $region48: #{tpu_custom_call.1} parent=5 // pred_fallthru
        _
      %p307 = scmp.le.s32.totalorder 1, %s18
      %p308 = scmp.lt.s32.totalorder %s18, 3
      %p309 = pnand %p307, %p308
      %p310 = pneg %p309
      // Predicated region
      $region53: #{tpu_custom_call.1} parent=5 // pred_check
        _
      $region54: #{tpu_custom_call.1} parent=5 // pred_check_branch
        %312 = sbr.rel (%p309) target = $region56
      $region55: #{tpu_custom_call.1} parent=5 // pred_region
        %s313 = ssub.s32 %s18, 1
        %p314 = scmp.lt.s32.totalorder %s27, 1
        %s315 = scalar_select %p314, %s27, 1
        %p316 = scmp.lt.s32.totalorder %s28, 0
        %s317 = scalar_select %p316, %s28, 0
        %s318 = sadd.s32 %s317, %s315
        %s319 = smul.addr %s318, 4
        %s320 = scalar_lea.vmem %s0, %s319
        %p321 = pneg %p58
        %p322 = pneg %p55
        %p323 = pneg %p79
        %p324 = pneg %p76
        %p325 = pneg %p100
        %p326 = pneg %p97
        %p327 = pneg %p121
        %p328 = pneg %p118
        %p329 = pneg %p142
        %p330 = pneg %p139
        %p331 = pneg %p163
        %p332 = pneg %p160
        %p333 = pneg %p184
        %p334 = pneg %p181
        %p335 = pneg %p205
        %p336 = pneg %p202
        %p337 = pneg %p226
        %p338 = pneg %p223
        %p339 = pneg %p254
        %p340 = pneg %p251
        %s341 = sand.u32 %s241, 1
        %s342 = scalar_lea.sflag [#allocation3], %s341
        %s343 = sand.u32 %s241, 1
        %s344 = smul.addr %s343, 4
        %s345 = scalar_lea.vmem [#allocation2], %s344
        %p346 = scmp.lt.s32.totalorder %s27, 1
        %s347 = scalar_select %p346, %s27, 1
        %p348 = scmp.lt.s32.totalorder %s28, 0
        %s349 = scalar_select %p348, %s28, 0
        %s350 = sadd.s32 %s349, %s347
        %s351 = smul.addr %s350, 4
        %s352 = scalar_lea.vmem %s0, %s351
        %v353 = vld [vmem:[%s352] sm:$0xf]
        %v354 = vadd.f32 %v353, %v353
        %v355 = vld [vmem:[%s1] sm:$0xf]
        %v356 = vld [vmem:[%s2] sm:$0xf]
        %358 = vset.pattern.permute.xlu0 0
        %359 = vperm.xlu0 %358, %v355
        %v360 = vpop.permute.xlu0 %359
        %v362 = vlaneseq
        %v363 = vshrl.u32 %v362, 7
        %v364 = vsub.s32 0, %v363
        %v365 = vrot.slane %v354, %v364
        %v366 = vmul.f32 %v360, %v365
        %367 = vset.pattern.permute.xlu0 1
        %368 = vperm.xlu0 %367, %v355
        %v369 = vpop.permute.xlu0 %368
        %v371 = vlaneseq
        %v372 = vshrl.u32 %v371, 7
        %v373 = vsub.s32 1, %v372
        %v374 = vrot.slane %v354, %v373
        %v375 = vmul.f32 %v369, %v374
        %v376 = vadd.f32 %v366, %v375
        %377 = vset.pattern.permute.xlu0 2
        %378 = vperm.xlu0 %377, %v355
        %v379 = vpop.permute.xlu0 %378
        %v381 = vlaneseq
        %v382 = vshrl.u32 %v381, 7
        %v383 = vsub.s32 2, %v382
        %v384 = vrot.slane %v354, %v383
        %v385 = vmul.f32 %v379, %v384
        %v386 = vadd.f32 %v376, %v385
        %387 = vset.pattern.permute.xlu0 3
        %388 = vperm.xlu0 %387, %v355
        %v389 = vpop.permute.xlu0 %388
        %v391 = vlaneseq
        %v392 = vshrl.u32 %v391, 7
        %v393 = vsub.s32 3, %v392
        %v394 = vrot.slane %v354, %v393
        %v395 = vmul.f32 %v389, %v394
        %v396 = vadd.f32 %v386, %v395
        %398 = vset.pattern.permute.xlu0 0
        %399 = vperm.xlu0 %398, %v356
        %v400 = vpop.permute.xlu0 %399
        %v402 = vadd.f32 %v396, %v400
        %v403 = vmax.f32 %v402, 0.0
        %v404 = vld [vmem:[%s3] sm:$0xf]
        %v405 = vld [vmem:[%s4] sm:$0xf]
        %407 = vset.pattern.permute.xlu0 0
        %408 = vperm.xlu0 %407, %v404
        %v409 = vpop.permute.xlu0 %408
        %v411 = vlaneseq
        %v412 = vshrl.u32 %v411, 7
        %v413 = vsub.s32 0, %v412
        %v414 = vrot.slane %v403, %v413
        %v415 = vmul.f32 %v409, %v414
        %416 = vset.pattern.permute.xlu0 1
        %417 = vperm.xlu0 %416, %v404
        %v418 = vpop.permute.xlu0 %417
        %v420 = vlaneseq
        %v421 = vshrl.u32 %v420, 7
        %v422 = vsub.s32 1, %v421
        %v423 = vrot.slane %v403, %v422
        %v424 = vmul.f32 %v418, %v423
        %v425 = vadd.f32 %v415, %v424
        %426 = vset.pattern.permute.xlu0 2
        %427 = vperm.xlu0 %426, %v404
        %v428 = vpop.permute.xlu0 %427
        %v430 = vlaneseq
        %v431 = vshrl.u32 %v430, 7
        %v432 = vsub.s32 2, %v431
        %v433 = vrot.slane %v403, %v432
        %v434 = vmul.f32 %v428, %v433
        %v435 = vadd.f32 %v425, %v434
        %436 = vset.pattern.permute.xlu0 3
        %437 = vperm.xlu0 %436, %v404
        %v438 = vpop.permute.xlu0 %437
        %v440 = vlaneseq
        %v441 = vshrl.u32 %v440, 7
        %v442 = vsub.s32 3, %v441
        %v443 = vrot.slane %v403, %v442
        %v444 = vmul.f32 %v438, %v443
        %v445 = vadd.f32 %v435, %v444
        %447 = vset.pattern.permute.xlu0 0
        %448 = vperm.xlu0 %447, %v405
        %v449 = vpop.permute.xlu0 %448
        %v451 = vadd.f32 %v445, %v449
        %v452 = vmax.f32 %v451, 0.0
        %v453 = vld [vmem:[%s5] sm:$0xf]
        %v454 = vld [vmem:[%s6] sm:$0xf]
        %456 = vset.pattern.permute.xlu0 0
        %457 = vperm.xlu0 %456, %v453
        %v458 = vpop.permute.xlu0 %457
        %v460 = vlaneseq
        %v461 = vshrl.u32 %v460, 7
        %v462 = vsub.s32 0, %v461
        %v463 = vrot.slane %v452, %v462
        %v464 = vmul.f32 %v458, %v463
        %465 = vset.pattern.permute.xlu0 1
        %466 = vperm.xlu0 %465, %v453
        %v467 = vpop.permute.xlu0 %466
        %v469 = vlaneseq
        %v470 = vshrl.u32 %v469, 7
        %v471 = vsub.s32 1, %v470
        %v472 = vrot.slane %v452, %v471
        %v473 = vmul.f32 %v467, %v472
        %v474 = vadd.f32 %v464, %v473
        %475 = vset.pattern.permute.xlu0 2
        %476 = vperm.xlu0 %475, %v453
        %v477 = vpop.permute.xlu0 %476
        %v479 = vlaneseq
        %v480 = vshrl.u32 %v479, 7
        %v481 = vsub.s32 2, %v480
        %v482 = vrot.slane %v452, %v481
        %v483 = vmul.f32 %v477, %v482
        %v484 = vadd.f32 %v474, %v483
        %485 = vset.pattern.permute.xlu0 3
        %486 = vperm.xlu0 %485, %v453
        %v487 = vpop.permute.xlu0 %486
        %v489 = vlaneseq
        %v490 = vshrl.u32 %v489, 7
        %v491 = vsub.s32 3, %v490
        %v492 = vrot.slane %v452, %v491
        %v493 = vmul.f32 %v487, %v492
        %v494 = vadd.f32 %v484, %v493
        %496 = vset.pattern.permute.xlu0 0
        %497 = vperm.xlu0 %496, %v454
        %v498 = vpop.permute.xlu0 %497
        %v500 = vadd.f32 %v494, %v498
        %v501 = vmax.f32 %v500, 0.0
        %v502 = vadd.f32 %v501, %v354
        %v503 = vld [vmem:[%s7] sm:$0xf]
        %v504 = vld [vmem:[%s8] sm:$0xf]
        %506 = vset.pattern.permute.xlu0 0
        %507 = vperm.xlu0 %506, %v503
        %v508 = vpop.permute.xlu0 %507
        %v510 = vlaneseq
        %v511 = vshrl.u32 %v510, 7
        %v512 = vsub.s32 0, %v511
        %v513 = vrot.slane %v502, %v512
        %v514 = vmul.f32 %v508, %v513
        %515 = vset.pattern.permute.xlu0 1
        %516 = vperm.xlu0 %515, %v503
        %v517 = vpop.permute.xlu0 %516
        %v519 = vlaneseq
        %v520 = vshrl.u32 %v519, 7
        %v521 = vsub.s32 1, %v520
        %v522 = vrot.slane %v502, %v521
        %v523 = vmul.f32 %v517, %v522
        %v524 = vadd.f32 %v514, %v523
        %525 = vset.pattern.permute.xlu0 2
        %526 = vperm.xlu0 %525, %v503
        %v527 = vpop.permute.xlu0 %526
        %v529 = vlaneseq
        %v530 = vshrl.u32 %v529, 7
        %v531 = vsub.s32 2, %v530
        %v532 = vrot.slane %v502, %v531
        %v533 = vmul.f32 %v527, %v532
        %v534 = vadd.f32 %v524, %v533
        %535 = vset.pattern.permute.xlu0 3
        %536 = vperm.xlu0 %535, %v503
        %v537 = vpop.permute.xlu0 %536
        %v539 = vlaneseq
        %v540 = vshrl.u32 %v539, 7
        %v541 = vsub.s32 3, %v540
        %v542 = vrot.slane %v502, %v541
        %v543 = vmul.f32 %v537, %v542
        %v544 = vadd.f32 %v534, %v543
        %546 = vset.pattern.permute.xlu0 0
        %547 = vperm.xlu0 %546, %v504
        %v548 = vpop.permute.xlu0 %547
        %v550 = vadd.f32 %v544, %v548
        %v551 = vmax.f32 %v550, 0.0
        %vm552 = vcmask 125952
        %553 = vst.msk [vmem:[%s345] sm:$0xf] %vm552, %v551
        %s554 = sand.u32 %s241, 1
        %s555 = scalar_lea.sflag [#allocation3], %s554
        %s556 = sand.u32 %s241, 1
        %s557 = smul.addr %s556, 4
        %s558 = scalar_lea.vmem [#allocation2], %s557
        // Predicated region
        $region57: #{tpu_custom_call.1} parent=55 // pred_check
          %p559 = pneg %p251
        $region58: #{tpu_custom_call.1} parent=55 // pred_check_branch
          %561 = sbr.rel (%p559) target = $region60
        $region59: #{tpu_custom_call.1} parent=55 // pred_region
          %s563 = ssub.s32 64, 64
          %564 = vsyncadd %s555, %s563
          %s565 = sadd.s32 %s28, %s27
          %s566 = smul.addr %s565, 64
          %s567 = scalar_lea.hbm %s9, %s566
          %s569 = sshll.u32 %s558, 4
          %s570 = int_to_ptr.vmem [resolvable:$true] %s569
          %572 = dma.vmem_to_hbm [thread:$0]  %s570, 64, %s567, %s555
        $region60: #{tpu_custom_call.1} parent=55 // pred_fallthru
          _
      $region56: #{tpu_custom_call.1} parent=5 // pred_fallthru
        _
      %p573 = scmp.le.s32.totalorder 2, %s18
      // Predicated region
      $region61: #{tpu_custom_call.1} parent=5 // pred_check
        %p574 = pneg %p573
      $region62: #{tpu_custom_call.1} parent=5 // pred_check_branch
        %576 = sbr.rel (%p574) target = $region64
      $region63: #{tpu_custom_call.1} parent=5 // pred_region
        %s577 = ssub.s32 %s18, 2
        // Predicated region
        $region65: #{tpu_custom_call.1} parent=63 // pred_check
          %p578 = pneg %p257
        $region66: #{tpu_custom_call.1} parent=63 // pred_check_branch
          %580 = sbr.rel (%p578) target = $region68
        $region67: #{tpu_custom_call.1} parent=63 // pred_region
          %s581 = sand.u32 %s242, 1
          %s582 = scalar_lea.sflag [#allocation3], %s581
          %s583 = sand.u32 %s242, 1
          %s584 = smul.addr %s583, 4
          %s585 = scalar_lea.vmem [#allocation2], %s584
          %586 = dma.done %s582, 64
        $region68: #{tpu_custom_call.1} parent=63 // pred_fallthru
          _
      $region64: #{tpu_custom_call.1} parent=5 // pred_fallthru
        _
    $region6: #{tpu_custom_call.1} parent=1 // loop_footer
      %s22 = sadd.s32 1, %s18
    $region7: #{tpu_custom_call.1} parent=1 // loop_footer_branch
      %17 = sbr.rel target = $region3
    $region8: #{tpu_custom_call.1} parent=1 // loop_exit
      _
    %587 = vsyncpa [#allocation3], 1
    %s588 = scalar_lea.sflag [#allocation3], 1
    %589 = vsyncpa %s588, 1

</llo_original>
